<compile_context>
chip_gen: v5e
topology: v5e:2x2
jax: 0.10.0
libtpu: 0.0.40
codegen_flags: <defaults>
</compile_context>

<pallas_src>
import functools

import jax
import jax.numpy as jnp
from jax import lax
from jax.experimental import pallas as pl
from jax.experimental.pallas import tpu as pltpu

# Safe on every generation: <= physical VMEM on v7x (64 MiB), raises the
# default scoped limit on v5e (16 MiB) so 256-class tiles double-buffer.
_VMEM_LIMIT = 32 * 1024 * 1024


def _tile(dim, target):
    """Largest tile == target that exactly divides dim, else the full dim."""
    return target if dim % target == 0 else dim


# ---------------------------------------------------------------------------
# Pallas kernels
# ---------------------------------------------------------------------------

def _linear_kernel(x_ref, w_ref, b_ref, o_ref, acc_ref, *, activation):
    """Tiled y = act(x @ w + b) with f32 accumulator over the K grid axis."""
    @pl.when(pl.program_id(2) == 0)
    def _():
        acc_ref[...] = jnp.zeros_like(acc_ref)

    acc_ref[...] += jnp.dot(x_ref[...], w_ref[...],
                            preferred_element_type=jnp.float32)

    @pl.when(pl.program_id(2) == pl.num_programs(2) - 1)
    def _():
        y = acc_ref[...] + b_ref[...]
        if activation == "gelu":
            # tanh-approx GELU (BERT intermediate activation)
            y = 0.5 * y * (1.0 + jnp.tanh(
                0.7978845608028654 * (y + 0.044715 * y * y * y)))
        o_ref[...] = y.astype(o_ref.dtype)


def linear(x2d, w, b, activation=None, *, tm=256, tn=256, tk=512):
    M, K = x2d.shape
    N = w.shape[1]
    tm, tn, tk = _tile(M, tm), _tile(N, tn), _tile(K, tk)
    return pl.pallas_call(
        functools.partial(_linear_kernel, activation=activation),
        out_shape=jax.ShapeDtypeStruct((M, N), jnp.float32),
        grid=(M // tm, N // tn, K // tk),
        in_specs=[
            pl.BlockSpec((tm, tk), lambda i, j, k: (i, k)),
            pl.BlockSpec((tk, tn), lambda i, j, k: (k, j)),
            pl.BlockSpec((1, tn), lambda i, j, k: (0, j)),
        ],
        out_specs=pl.BlockSpec((tm, tn), lambda i, j, k: (i, j)),
        scratch_shapes=[pltpu.VMEM((tm, tn), jnp.float32)],
        compiler_params=pltpu.CompilerParams(
            dimension_semantics=("parallel", "parallel", "arbitrary"),
            vmem_limit_bytes=_VMEM_LIMIT),
    )(x2d, w, b.reshape(1, N))


def _linear_add_ln_kernel(x_ref, w_ref, b_ref, r_ref, g_ref, beta_ref,
                          o_ref, acc_ref, *, eps):
    """Tiled y = LayerNorm(x @ w + b + residual) * gamma + beta.

    N is untiled (full hidden width) so the LayerNorm reduction is a pure
    epilogue of the matmul accumulator on the last K step.
    """
    @pl.when(pl.program_id(1) == 0)
    def _():
        acc_ref[...] = jnp.zeros_like(acc_ref)

    acc_ref[...] += jnp.dot(x_ref[...], w_ref[...],
                            preferred_element_type=jnp.float32)

    @pl.when(pl.program_id(1) == pl.num_programs(1) - 1)
    def _():
        h = acc_ref[...] + b_ref[...] + r_ref[...]
        mean = jnp.mean(h, axis=-1, keepdims=True)
        cen = h - mean
        var = jnp.mean(cen * cen, axis=-1, keepdims=True)
        o_ref[...] = ((cen * lax.rsqrt(var + eps)) * g_ref[...]
                      + beta_ref[...]).astype(o_ref.dtype)


def linear_add_layernorm(x2d, w, b, residual2d, gamma, beta,
                         eps=1e-12, *, tm=256, tk=512):
    M, K = x2d.shape
    N = w.shape[1]
    tm, tk = _tile(M, tm), _tile(K, tk)
    return pl.pallas_call(
        functools.partial(_linear_add_ln_kernel, eps=eps),
        out_shape=jax.ShapeDtypeStruct((M, N), jnp.float32),
        grid=(M // tm, K // tk),
        in_specs=[
            pl.BlockSpec((tm, tk), lambda i, k: (i, k)),
            pl.BlockSpec((tk, N), lambda i, k: (k, 0)),
            pl.BlockSpec((1, N), lambda i, k: (0, 0)),
            pl.BlockSpec((tm, N), lambda i, k: (i, 0)),
            pl.BlockSpec((1, N), lambda i, k: (0, 0)),
            pl.BlockSpec((1, N), lambda i, k: (0, 0)),
        ],
        out_specs=pl.BlockSpec((tm, N), lambda i, k: (i, 0)),
        scratch_shapes=[pltpu.VMEM((tm, N), jnp.float32)],
        compiler_params=pltpu.CompilerParams(
            dimension_semantics=("parallel", "arbitrary"),
            vmem_limit_bytes=_VMEM_LIMIT),
    )(x2d, w, b.reshape(1, N), residual2d,
      gamma.reshape(1, N), beta.reshape(1, N))


def _ln_kernel(x_ref, g_ref, b_ref, o_ref, *, eps):
    """Plain LayerNorm over the last axis (no residual input)."""
    h = x_ref[...]
    mean = jnp.mean(h, axis=-1, keepdims=True)
    cen = h - mean
    var = jnp.mean(cen * cen, axis=-1, keepdims=True)
    o_ref[...] = (cen * lax.rsqrt(var + eps)) * g_ref[...] + b_ref[...]


def layernorm(x2d, gamma, beta, eps=1e-12, *, tm=512):
    M, H = x2d.shape
    tm = _tile(M, tm)
    return pl.pallas_call(
        functools.partial(_ln_kernel, eps=eps),
        out_shape=jax.ShapeDtypeStruct((M, H), jnp.float32),
        grid=(M // tm,),
        in_specs=[
            pl.BlockSpec((tm, H), lambda i: (i, 0)),
            pl.BlockSpec((1, H), lambda i: (0, 0)),
            pl.BlockSpec((1, H), lambda i: (0, 0)),
        ],
        out_specs=pl.BlockSpec((tm, H), lambda i: (i, 0)),
        compiler_params=pltpu.CompilerParams(
            dimension_semantics=("parallel",),
            vmem_limit_bytes=_VMEM_LIMIT),
    )(x2d, gamma.reshape(1, H), beta.reshape(1, H))


def _attn_kernel(qkv_ref, m_ref, o_ref, *, num_heads, scale):
    """All-heads scaled-dot-product attention for one batch element.

    qkv_ref: (1, S, 3H) packed [Q | K | V]; m_ref: (1, 1, S) additive bias.
    """
    S = qkv_ref.shape[1]
    H = qkv_ref.shape[2] // 3
    dH = H // num_heads
    qkv = qkv_ref[0]          # (S, 3H)
    mask = m_ref[0]           # (1, S) -> broadcast over query rows

    ctx = []
    for h in range(num_heads):
        q = qkv[:, h * dH:(h + 1) * dH]                    # (S, dH)
        k = qkv[:, H + h * dH:H + (h + 1) * dH]            # (S, dH)
        v = qkv[:, 2 * H + h * dH:2 * H + (h + 1) * dH]    # (S, dH)
        # contract feature dims directly (no explicit k.T / XLU transpose)
        s = lax.dot_general(q, k, (((1,), (1,)), ((), ())),
                            preferred_element_type=jnp.float32) * scale
        s = s + mask
        s = s - jnp.max(s, axis=-1, keepdims=True)
        p = jnp.exp(s)
        p = p * pl.reciprocal(jnp.sum(p, axis=-1, keepdims=True), approx=True)
        ctx.append(jnp.dot(p, v, preferred_element_type=jnp.float32))
    # single wide (lane-dense) store of the merged heads
    o_ref[0] = jnp.concatenate(ctx, axis=-1).astype(o_ref.dtype)


def attention(qkv_bs3h, mask_bias, num_heads, scale):
    # qkv_bs3h: (B, S, 3H); mask_bias: (B, 1, S) -> out (B, S, H)
    B, S, H3 = qkv_bs3h.shape
    H = H3 // 3
    return pl.pallas_call(
        functools.partial(_attn_kernel, num_heads=num_heads, scale=scale),
        out_shape=jax.ShapeDtypeStruct((B, S, H), jnp.float32),
        grid=(B,),
        in_specs=[
            pl.BlockSpec((1, S, H3), lambda b: (b, 0, 0)),
            pl.BlockSpec((1, 1, S), lambda b: (b, 0, 0)),
        ],
        out_specs=pl.BlockSpec((1, S, H), lambda b: (b, 0, 0)),
        compiler_params=pltpu.CompilerParams(
            dimension_semantics=("parallel",),
            vmem_limit_bytes=_VMEM_LIMIT),
    )(qkv_bs3h, mask_bias)


# ---------------------------------------------------------------------------
# Parameter construction (deterministic synthetic "BERT + MLP head")
# ---------------------------------------------------------------------------

def init_params(key, vocab=100, max_pos=16, types=2, hidden=32,
                layers=2, heads=4, intermediate=64):
    def nxt():
        nonlocal key
        key, sub = jax.random.split(key)
        return sub

    std = 0.02
    head_w = jax.random.normal(nxt(), (hidden, 2), jnp.float32) * std
    # Pad the (H -> 2) head to 128 output lanes so the kernel's stores are
    # lane-dense/unmasked; the wrapper slices the first 2 columns.
    head_w_pad = jnp.zeros((hidden, 128), jnp.float32).at[:, :2].set(head_w)
    head_b_pad = jnp.zeros((128,), jnp.float32)

    p = dict(
        word_emb=jax.random.normal(nxt(), (vocab, hidden), jnp.float32) * std,
        pos_emb=jax.random.normal(nxt(), (max_pos, hidden), jnp.float32) * std,
        type_emb=jax.random.normal(nxt(), (types, hidden), jnp.float32) * std,
        emb_ln_g=jnp.ones((hidden,), jnp.float32),
        emb_ln_b=jnp.zeros((hidden,), jnp.float32),
        layers=[],
        head_w=head_w_pad,
        head_b=head_b_pad,
        heads=heads,
        max_pos=max_pos,
    )
    for _ in range(layers):
        lp = dict(
            # fused Q/K/V projection: one (H, 3H) matmul
            wqkv=jax.random.normal(nxt(), (hidden, 3 * hidden), jnp.float32) * std,
            bqkv=jnp.zeros((3 * hidden,), jnp.float32),
            wo=jax.random.normal(nxt(), (hidden, hidden), jnp.float32) * std,
            bo=jnp.zeros((hidden,), jnp.float32),
            ln1_g=jnp.ones((hidden,), jnp.float32),
            ln1_b=jnp.zeros((hidden,), jnp.float32),
            w1=jax.random.normal(nxt(), (hidden, intermediate), jnp.float32) * std,
            b1=jnp.zeros((intermediate,), jnp.float32),
            w2=jax.random.normal(nxt(), (intermediate, hidden), jnp.float32) * std,
            b2=jnp.zeros((hidden,), jnp.float32),
            ln2_g=jnp.ones((hidden,), jnp.float32),
            ln2_b=jnp.zeros((hidden,), jnp.float32),
        )
        p["layers"].append(lp)
    return p


# ---------------------------------------------------------------------------
# MrcHead forward: sequence_outputs = BERT(...); logits = MLP(sequence_outputs)
# ---------------------------------------------------------------------------

def mrc_head_forward(params, input_ids, attention_mask=None, token_type_ids=None):
    B, S = input_ids.shape
    H = params["word_emb"].shape[1]
    nH = params["heads"]
    dH = H // nH
    assert S <= params["max_pos"], "sequence length exceeds position table"

    if attention_mask is None:
        attention_mask = jnp.ones((B, S), jnp.int32)
    if token_type_ids is None:
        token_type_ids = jnp.zeros((B, S), jnp.int32)

    # ---- embeddings (gathers = glue) + Pallas LayerNorm (no residual) ----
    h = (jnp.take(params["word_emb"], input_ids, axis=0)
         + params["pos_emb"][:S][None, :, :]
         + jnp.take(params["type_emb"], token_type_ids, axis=0))
    h2d = layernorm(h.reshape(B * S, H), params["emb_ln_g"], params["emb_ln_b"])

    # additive padding-mask bias, kept at (B, 1, S); heads broadcast in-kernel
    mask_bias = ((1.0 - attention_mask.astype(jnp.float32)) * -10000.0)[:, None, :]
    scale = 1.0 / (dH ** 0.5)

    # ---- transformer encoder layers ----
    for lp in params["layers"]:
        qkv = linear(h2d, lp["wqkv"], lp["bqkv"])                 # (B*S, 3H)
        ctx = attention(qkv.reshape(B, S, 3 * H), mask_bias, nH, scale)
        ctx2d = ctx.reshape(B * S, H)

        # out-projection with fused residual-add + LayerNorm epilogue
        h2d = linear_add_layernorm(ctx2d, lp["wo"], lp["bo"], h2d,
                                   lp["ln1_g"], lp["ln1_b"])

        ffn = linear(h2d, lp["w1"], lp["b1"], activation="gelu")
        # FFN-down with fused residual-add + LayerNorm epilogue
        h2d = linear_add_layernorm(ffn, lp["w2"], lp["b2"], h2d,
                                   lp["ln2_g"], lp["ln2_b"])

    # ---- MRC head: Linear(hidden -> 2), computed 128-wide then sliced ----
    start_end_logits = linear(h2d, params["head_w"], params["head_b"])[:, :2]
    return start_end_logits.reshape(B, S, 2)


# ---------------------------------------------------------------------------

if __name__ == "__main__":
    key = jax.random.PRNGKey(0)
    params = init_params(key)

    B, S = 2, 8
    k1, k2 = jax.random.split(jax.random.PRNGKey(0))
    input_ids = jax.random.randint(k1, (B, S), 0, 100, dtype=jnp.int32)
    attention_mask = jnp.ones((B, S), jnp.int32)
    token_type_ids = jnp.concatenate(
        [jnp.zeros((B, S // 2), jnp.int32), jnp.ones((B, S // 2), jnp.int32)], axis=1)

    logits = mrc_head_forward(params, input_ids, attention_mask, token_type_ids)
    logits = jax.block_until_ready(logits)

    assert logits.shape == (B, S, 2), logits.shape
    assert logits.dtype == jnp.float32
    assert bool(jnp.all(jnp.isfinite(logits)))
    print("KERNEL_OK")
</pallas_src>

<mosaic_0001>
module attributes {stable_mosaic.version = 11 : i64} {
  func.func @_ln_kernel(%arg0: i32, %arg1: memref<16x32xf32, #tpu.memory_space<vmem>>, %arg2: memref<1x32xf32, #tpu.memory_space<vmem>>, %arg3: memref<1x32xf32, #tpu.memory_space<vmem>>, %arg4: memref<16x32xf32, #tpu.memory_space<vmem>>) attributes {dimension_semantics = [#tpu.dimension_semantics<parallel>], iteration_bounds = array<i64: 1>, scalar_prefetch = 0 : i64, scratch_operands = 0 : i64, tpu.core_type = #tpu.core_type<tc>, window_params = [{transform_indices = @transform_0, window_bounds = array<i64: 16, 32>}, {pipeline_mode = #tpu.pipeline_mode<synchronous>, transform_indices = @transform_1, window_bounds = array<i64: 1, 32>}, {pipeline_mode = #tpu.pipeline_mode<synchronous>, transform_indices = @transform_2, window_bounds = array<i64: 1, 32>}, {transform_indices = @transform_3, window_bounds = array<i64: 16, 32>}]} {
    %c0 = arith.constant 0 : index
    %c0_0 = arith.constant 0 : index
    %0 = vector.load %arg1[%c0, %c0_0] : memref<16x32xf32, #tpu.memory_space<vmem>>, vector<16x32xf32>
    %cst = arith.constant dense<0.000000e+00> : vector<16xf32>
    %1 = vector.multi_reduction <add>, %0, %cst [1] : vector<16x32xf32> to vector<16xf32>
    %2 = vector.shape_cast %1 : vector<16xf32> to vector<16x1xf32>
    %cst_1 = arith.constant 3.200000e+01 : f32
    %3 = vector.broadcast %cst_1 : f32 to vector<16x1xf32>
    %4 = arith.divf %2, %3 : vector<16x1xf32>
    %5 = vector.broadcast %4 : vector<16x1xf32> to vector<16x32xf32>
    %6 = arith.subf %0, %5 : vector<16x32xf32>
    %7 = arith.mulf %6, %6 : vector<16x32xf32>
    %cst_2 = arith.constant dense<0.000000e+00> : vector<16xf32>
    %8 = vector.multi_reduction <add>, %7, %cst_2 [1] : vector<16x32xf32> to vector<16xf32>
    %9 = vector.shape_cast %8 : vector<16xf32> to vector<16x1xf32>
    %cst_3 = arith.constant 3.200000e+01 : f32
    %10 = vector.broadcast %cst_3 : f32 to vector<16x1xf32>
    %11 = arith.divf %9, %10 : vector<16x1xf32>
    %cst_4 = arith.constant 9.99999996E-13 : f32
    %12 = vector.broadcast %cst_4 : f32 to vector<16x1xf32>
    %13 = arith.addf %11, %12 : vector<16x1xf32>
    %14 = math.rsqrt %13 : vector<16x1xf32>
    %15 = vector.broadcast %14 : vector<16x1xf32> to vector<16x32xf32>
    %16 = arith.mulf %6, %15 : vector<16x32xf32>
    %c0_5 = arith.constant 0 : index
    %c0_6 = arith.constant 0 : index
    %17 = vector.load %arg2[%c0_5, %c0_6] : memref<1x32xf32, #tpu.memory_space<vmem>>, vector<1x32xf32>
    %18 = vector.broadcast %17 : vector<1x32xf32> to vector<16x32xf32>
    %19 = arith.mulf %16, %18 : vector<16x32xf32>
    %c0_7 = arith.constant 0 : index
    %c0_8 = arith.constant 0 : index
    %20 = vector.load %arg3[%c0_7, %c0_8] : memref<1x32xf32, #tpu.memory_space<vmem>>, vector<1x32xf32>
    %21 = vector.broadcast %20 : vector<1x32xf32> to vector<16x32xf32>
    %22 = arith.addf %19, %21 : vector<16x32xf32>
    %c0_9 = arith.constant 0 : index
    %c0_10 = arith.constant 0 : index
    %23 = vector.load %arg4[%c0_9, %c0_10] : memref<16x32xf32, #tpu.memory_space<vmem>>, vector<16x32xf32>
    tpu.vector_store %arg4[%c0_9, %c0_10], %22 {strides = array<i32>} : memref<16x32xf32, #tpu.memory_space<vmem>>, vector<16x32xf32>,
    return
  }
  func.func @transform_0(%arg0: i32) -> (i32, i32) {
    %c0_i32 = arith.constant 0 : i32
    %c0_i32_0 = arith.constant 0 : i32
    return %arg0, %c0_i32 : i32, i32
  }
  func.func @transform_1(%arg0: i32) -> (i32, i32) {
    %c0_i32 = arith.constant 0 : i32
    %c0_i32_0 = arith.constant 0 : i32
    %c0_i32_1 = arith.constant 0 : i32
    return %c0_i32, %c0_i32_0 : i32, i32
  }
  func.func @transform_2(%arg0: i32) -> (i32, i32) {
    %c0_i32 = arith.constant 0 : i32
    %c0_i32_0 = arith.constant 0 : i32
    %c0_i32_1 = arith.constant 0 : i32
    return %c0_i32, %c0_i32_0 : i32, i32
  }
  func.func @transform_3(%arg0: i32) -> (i32, i32) {
    %c0_i32 = arith.constant 0 : i32
    %c0_i32_0 = arith.constant 0 : i32
    return %arg0, %c0_i32 : i32, i32
  }
}

</mosaic_0001>

<llo_original>
// kernel: tpu_custom_call.1
$region0: #{tpu_custom_call.1}
  #allocation0 [shape = 'u32[]', space=smem, size = 0x4, offset = 0x4, fixed_abs, tag = 'smem constant byte address 0x4 - core index']
  #allocation1 [shape = 'u32[72,128]{1,0:T(1,128)}', space=vmem, size = 0x9000, scoped, tag = 'internal scratch']
  %s0 = inlined_call_operand.hbm [shape: f32[16,32], index: 0, kind: input, shape index: {}]
  %s1 = inlined_call_operand.hbm [shape: f32[1,32], index: 1, kind: input, shape index: {}]
  %s2 = inlined_call_operand.vmem [shape: f32[1,32], index: 2, kind: input, shape index: {}]
  %s3 = inlined_call_operand.hbm [shape: f32[16,32], index: 3, kind: output, shape index: {}]
  %s4 = sld [smem:[#allocation0]]
  $region30: #{tpu_custom_call.1} parent=0
    _
  %s6 = ssub.s32 1, %s4
  %s7 = scalar_select 0, %s6, %s4
  $region1: #{tpu_custom_call.1} parent=0
    #allocation2 [shape = 'u8[8192]{0}', space=vmem, size = 0x2000, scoped, tag = 'input window, operand 0, single buffered']
    #allocation3 [shape = 's32[1]{0}', space=sflag, size = 0x4, scoped, tag = 'scoped memory for tpu_custom_call.1']
    #allocation4 [shape = 's32[1]{0}', space=sflag, size = 0x4, scoped, tag = 'scoped memory for tpu_custom_call.1']
    #allocation5 [shape = 'u8[512]{0}', space=vmem, size = 0x400, scoped, tag = 'input window, operand 1, single buffered']
    #allocation6 [shape = 's32[1]{0}', space=sflag, size = 0x4, scoped, tag = 'scoped memory for tpu_custom_call.1']
    #allocation7 [shape = 'u8[8192]{0}', space=vmem, size = 0x2000, scoped, tag = 'output window, operand 0, single buffered']
    %8 = vsyncpa [#allocation3], 0
    %9 = vsyncpa [#allocation6], 0
    %10 = vsyncpa [#allocation4], 0
    // Predicated region
    $region2: #{tpu_custom_call.1} parent=1 // pred_check
      _
    $region3: #{tpu_custom_call.1} parent=1 // pred_check_branch
      %12 = sbr.rel (0) target = $region5
    $region4: #{tpu_custom_call.1} parent=1 // pred_region
      %14 = vsyncadd [#allocation3], 0
      %s15 = sshll.u32 %s0, 4
      %s16 = int_to_ptr.hbm [resolvable:$true] %s15
      %s17 = sshll.u32 [#allocation2], 4
      %s18 = int_to_ptr.vmem [resolvable:$true] %s17
      %23 = dma.hbm_to_vmem [thread:$0]  %s16, 256, %s18, [#allocation3], 128, 128, 8
    $region5: #{tpu_custom_call.1} parent=1 // pred_fallthru
      _
    // Predicated region
    $region6: #{tpu_custom_call.1} parent=1 // pred_check
      _
    $region7: #{tpu_custom_call.1} parent=1 // pred_check_branch
      %25 = sbr.rel (0) target = $region9
    $region8: #{tpu_custom_call.1} parent=1 // pred_region
      %27 = vsyncadd [#allocation6], 0
      %s29 = sshll.u32 %s1, 4
      %s30 = int_to_ptr.hbm [resolvable:$true] %s29
      %s31 = sshll.u32 [#allocation5], 4
      %s32 = int_to_ptr.vmem [resolvable:$true] %s31
      %34 = dma.hbm_to_vmem [thread:$0]  %s30, 16, %s32, [#allocation6]
    $region9: #{tpu_custom_call.1} parent=1 // pred_fallthru
      _
    // Predicated region
    $region10: #{tpu_custom_call.1} parent=1 // pred_check
      _
    $region11: #{tpu_custom_call.1} parent=1 // pred_check_branch
      %36 = sbr.rel (0) target = $region13
    $region12: #{tpu_custom_call.1} parent=1 // pred_region
      _
    $region13: #{tpu_custom_call.1} parent=1 // pred_fallthru
      _
    // Predicated region
    $region14: #{tpu_custom_call.1} parent=1 // pred_check
      _
    $region15: #{tpu_custom_call.1} parent=1 // pred_check_branch
      %38 = sbr.rel (0) target = $region17
    $region16: #{tpu_custom_call.1} parent=1 // pred_region
      %40 = dma.done [#allocation3], 256
    $region17: #{tpu_custom_call.1} parent=1 // pred_fallthru
      _
    // Predicated region
    $region18: #{tpu_custom_call.1} parent=1 // pred_check
      _
    $region19: #{tpu_custom_call.1} parent=1 // pred_check_branch
      %42 = sbr.rel (0) target = $region21
    $region20: #{tpu_custom_call.1} parent=1 // pred_region
      %44 = dma.done [#allocation6], 16
    $region21: #{tpu_custom_call.1} parent=1 // pred_fallthru
      _
    %v45 = vld [vmem:[#allocation2] sm:$0xff]
    %v46 = vld [vmem:[#allocation2 + $0x8] sm:$0xff]
    %vm47 = vcmask 261120
    %v48 = vsel %vm47, %v45, 0.0
    %49 = vadd.xlane.f32.xlu0 %v48
    %v50 = vpop.xlane.xlu0 %49
    %v51 = vsel %vm47, %v46, 0.0
    %52 = vadd.xlane.f32.xlu0 %v51
    %v53 = vpop.xlane.xlu0 %52
    %v54 = vrcp.pop 32.0
    %v55 = vmul.f32 32.0, %v54
    %v56 = vsub.f32 1.0, %v55
    %v57 = vmul.f32 %v54, %v56
    %v58 = vadd.f32 %v54, %v57
    %vm59 = vweird.f32 %v54
    %v60 = vsel %vm59, %v54, %v58
    %v61 = vmul.f32 %v50, %v60
    %v62 = vmul.f32 %v53, %v60
    %v63 = vsub.f32 %v45, %v61
    %v64 = vsub.f32 %v46, %v62
    %v65 = vmul.f32 %v63, %v63
    %v66 = vmul.f32 %v64, %v64
    %v67 = vsel %vm47, %v65, 0.0
    %68 = vadd.xlane.f32.xlu0 %v67
    %v69 = vpop.xlane.xlu0 %68
    %v70 = vsel %vm47, %v66, 0.0
    %71 = vadd.xlane.f32.xlu0 %v70
    %v72 = vpop.xlane.xlu0 %71
    %v73 = vmul.f32 %v69, %v60
    %v74 = vmul.f32 %v72, %v60
    %v75 = vadd.f32 %v73, 1e-12
    %v76 = vadd.f32 %v74, 1e-12
    %v77 = vrsqrt.pop %v75
    %v78 = vmul.f32 %v77, %v75
    %v79 = vmul.f32 %v78, %v77
    %v80 = vmul.f32 0.5, %v79
    %v81 = vsub.f32 1.5, %v80
    %v82 = vmul.f32 %v77, %v81
    %vm83 = vweird.f32 %v75
    %vm84 = vweird.f32 %v77
    %vm85 = vmor %vm83, %vm84
    %v86 = vsel %vm85, %v77, %v82
    %v87 = vrsqrt.pop %v76
    %v88 = vmul.f32 %v87, %v76
    %v89 = vmul.f32 %v88, %v87
    %v90 = vmul.f32 0.5, %v89
    %v91 = vsub.f32 1.5, %v90
    %v92 = vmul.f32 %v87, %v91
    %vm93 = vweird.f32 %v76
    %vm94 = vweird.f32 %v87
    %vm95 = vmor %vm93, %vm94
    %v96 = vsel %vm95, %v87, %v92
    %v97 = vmul.f32 %v63, %v86
    %v98 = vmul.f32 %v64, %v96
    %v99 = vld [vmem:[#allocation5] sm:$0x1]
    %v101 = vperm.slane %v99, 0
    %v103 = vmul.f32 %v97, %v101
    %v104 = vmul.f32 %v98, %v101
    %v105 = vld [vmem:[%s2] sm:$0x1]
    %v107 = vperm.slane %v105, 0
    %v109 = vadd.f32 %v103, %v107
    %v110 = vadd.f32 %v104, %v107
    %111 = vst.msk [vmem:[#allocation7] sm:$0xff] %vm47, %v109
    %112 = vst.msk [vmem:[#allocation7 + $0x8] sm:$0xff] %vm47, %v110
    // Predicated region
    $region22: #{tpu_custom_call.1} parent=1 // pred_check
      _
    $region23: #{tpu_custom_call.1} parent=1 // pred_check_branch
      %114 = sbr.rel (0) target = $region25
    $region24: #{tpu_custom_call.1} parent=1 // pred_region
      %116 = vsyncadd [#allocation4], 0
      %s117 = sshll.u32 [#allocation7], 4
      %s118 = int_to_ptr.vmem [resolvable:$true] %s117
      %s119 = sshll.u32 %s3, 4
      %s120 = int_to_ptr.hbm [resolvable:$true] %s119
      %125 = dma.vmem_to_hbm [thread:$0]  %s118, 256, %s120, [#allocation4], 128, 128, 8
    $region25: #{tpu_custom_call.1} parent=1 // pred_fallthru
      _
    // Predicated region
    $region26: #{tpu_custom_call.1} parent=1 // pred_check
      _
    $region27: #{tpu_custom_call.1} parent=1 // pred_check_branch
      %127 = sbr.rel (0) target = $region29
    $region28: #{tpu_custom_call.1} parent=1 // pred_region
      %129 = dma.done [#allocation4], 256
    $region29: #{tpu_custom_call.1} parent=1 // pred_fallthru
      _
    %130 = vsyncpa [#allocation3], 1
    %131 = vsyncpa [#allocation6], 1
    %132 = vsyncpa [#allocation4], 1

</llo_original>
